<compile_context>
chip_gen: v7x
topology: tpu7x:2x2x1
jax: 0.10.0
libtpu: 0.0.40
codegen_flags: <defaults>
</compile_context>

<pallas_src>
import numpy as np
import jax
import jax.numpy as jnp
from jax.experimental import pallas as pl
from jax.experimental.pallas import tpu as pltpu


def _fused_conv_bias_prelu_kernel(alpha_ref, x_ref, wb_ref, b_ref, out_ref, im_ref):
    """One batch-block (NB elements) per grid step.

    alpha_ref : SMEM (1, 1)                    PReLU slope
    x_ref     : VMEM (NB, H, Cin*W)            input rows, (cin, w) minor order (f32)
    wb_ref    : VMEM (KH*Cin*W, W*Cout)        banded conv weight, bf16
    b_ref     : VMEM (1, W*Cout)               bias in (rh, co, w, rw) order (f32)
    out_ref   : VMEM (NB, H, W*Cout)           conv+bias+PReLU output, lane-dense
    im_ref    : VMEM scratch (NB, H, KH*Cin*W) bf16 im2col (3 H-shifted copies)
    """
    nb, H, CW = x_ref.shape
    WC = out_ref.shape[-1]
    mxu_dtype = im_ref.dtype

    # Single f32 -> bf16 cast of the input block.
    xb = x_ref[...].astype(mxu_dtype)                     # (NB, H, CW)
    zrow = jnp.zeros((nb, 1, CW), mxu_dtype)

    # im2col columns are dh-major.  H zero padding handled at the boundary
    # rows only; W zero padding is encoded inside the banded weight.
    im_ref[:, 1:H, 0:CW] = xb[:, 0:H - 1, :]              # dh = 0  (row h-1)
    im_ref[:, 0:1, 0:CW] = zrow
    im_ref[:, :, CW:2 * CW] = xb                          # dh = 1  (row h)
    im_ref[:, 0:H - 1, 2 * CW:3 * CW] = xb[:, 1:H, :]     # dh = 2  (row h+1)
    im_ref[:, H - 1:H, 2 * CW:3 * CW] = zrow

    # One MXU contraction: (NB*H, 3*Cin*W) @ (3*Cin*W, W*Cout), f32 accumulate.
    lhs = im_ref[...].reshape(nb * H, 3 * CW)
    acc = jnp.dot(lhs, wb_ref[...], preferred_element_type=jnp.float32)

    acc = acc + b_ref[...]                                # bias (broadcast over M)
    alpha = alpha_ref[0, 0]
    y = jnp.where(acc > 0, acc, alpha * acc)              # shared-param PReLU (f32)
    out_ref[...] = y.reshape(nb, H, WC).astype(out_ref.dtype)


def build_upsample_params(w_hwio, bias, W, up_scale, *, mxu_dtype=jnp.bfloat16):
    """Pre-compute the banded conv weight + permuted bias row.

    Called once per weight update (outside the hot path).

    wb_flat[(dh*Cin + cin)*W + w', ((rh*Co + co)*W + w)*r + rw]
        = w_hwio[dh, w'-w+1, cin, co*r*r + rh*r + rw]   (0 if w'-w+1 not in 0..2)
    i.e. rows are (dh, cin, w') to match the transpose(0,2,1,3) input layout and
    columns are (rh, co, w, rw) so the output pixel shuffle keeps W*r trailing.
    """
    KH, KW, Cin, Cout = w_hwio.shape
    r = up_scale
    Co = Cout // (r * r)
    assert Co * r * r == Cout

    # P[dw, w', w] = 1 iff w' == w + dw - 1  (static numpy constant).
    P = np.stack([np.eye(W, k=1 - dw, dtype=np.float32) for dw in range(KW)])
    w6 = w_hwio.reshape(KH, KW, Cin, Co, r, r)            # (dh, dw, cin, co, rh, rw)
    # -> (dh, cin, w', rh, co, w, rw)
    wb = jnp.einsum("xpq,hxicab->hipacqb", P, w6)
    wb_flat = wb.reshape(KH * Cin * W, r * Co * W * r).astype(mxu_dtype)

    b6 = bias.reshape(Co, r, r)                           # (co, rh, rw)
    b_perm = jnp.transpose(b6, (1, 0, 2))                 # (rh, co, rw)
    bias_row = jnp.broadcast_to(
        b_perm[:, :, None, :], (r, Co, W, r)).reshape(1, W * Cout).astype(jnp.float32)
    return wb_flat, bias_row


def _pick_batch_block(N, H, target_m=256):
    """Largest divisor of N with NB*H <= target_m (fold batch into matmul M)."""
    nb = min(N, max(1, target_m // H))
    while N % nb != 0:
        nb -= 1
    return nb


def conv3x3_bias_prelu(x_nchw, wb_flat, bias_row, alpha, *, nb=None):
    """Fused conv3x3(pad=1) + bias + PReLU.  Input NCHW, output (N, H, W*Cout)."""
    N, Cin, H, W = x_nchw.shape
    K, WC = wb_flat.shape
    assert K == 3 * Cin * W

    if nb is None:
        # On v7x (2 TensorCores) prefer nb = N // 2 to keep 2 "parallel" steps.
        nb = _pick_batch_block(N, H)
    assert N % nb == 0

    # NCHW -> (N, H, Cin*W): lane-preserving permute (W stays the minor dim).
    x_rows = jnp.transpose(x_nchw, (0, 2, 1, 3)).reshape(N, H, Cin * W)
    alpha2d = jnp.asarray(alpha, jnp.float32).reshape(1, 1)

    flops = 2 * N * H * K * WC
    bytes_accessed = (x_rows.size * x_rows.dtype.itemsize
                      + wb_flat.size * wb_flat.dtype.itemsize
                      + bias_row.size * bias_row.dtype.itemsize
                      + N * H * WC * x_nchw.dtype.itemsize)

    return pl.pallas_call(
        _fused_conv_bias_prelu_kernel,
        out_shape=jax.ShapeDtypeStruct((N, H, WC), x_nchw.dtype),
        grid=(N // nb,),
        in_specs=[
            pl.BlockSpec(memory_space=pltpu.MemorySpace.SMEM),          # alpha
            pl.BlockSpec((nb, H, Cin * W), lambda g: (g, 0, 0)),        # x rows
            pl.BlockSpec((K, WC), lambda g: (0, 0)),                    # banded W (grid-invariant)
            pl.BlockSpec((1, WC), lambda g: (0, 0)),                    # bias row
        ],
        out_specs=pl.BlockSpec((nb, H, WC), lambda g: (g, 0, 0)),
        scratch_shapes=[pltpu.VMEM((nb, H, K), wb_flat.dtype)],         # bf16 im2col
        compiler_params=pltpu.CompilerParams(
            dimension_semantics=("parallel",)),
        cost_estimate=pl.CostEstimate(
            flops=flops, transcendentals=0, bytes_accessed=bytes_accessed),
    )(alpha2d, x_rows, wb_flat, bias_row)


def upsample_block(x_nchw, wb_flat, bias_row, alpha, up_scale, *, nb=None):
    """Full UpsampleBLock forward. Input NCHW, output NCHW (like PyTorch)."""
    N, Cin, H, W = x_nchw.shape
    r = up_scale
    WC = wb_flat.shape[1]
    Co = WC // (W * r * r)
    assert Co * W * r * r == WC

    y = conv3x3_bias_prelu(x_nchw, wb_flat, bias_row, alpha, nb=nb)

    # Kernel output columns are (rh, co, w, rw): pixel shuffle + NCHW becomes a
    # single 5-D transpose with the lane-dense trailing dim W*r.
    y = y.reshape(N, H, r, Co, W * r)
    y = jnp.transpose(y, (0, 3, 1, 2, 4))                  # N, Co, H, r, W*r
    return y.reshape(N, Co, H * r, W * r)


if __name__ == "__main__":
    # Module config: in_channels=4, up_scale=2, noise_dim=0 (no noise branch).
    N, Cin, H, W = 2, 4, 16, 16
    up_scale = 2
    Cout = Cin * up_scale ** 2   # 16

    key = jax.random.PRNGKey(0)
    kx, kw, kb = jax.random.split(key, 3)
    x = jax.random.normal(kx, (N, Cin, H, W), dtype=jnp.float32)
    # Deterministic synthetic parameters (shapes match nn.Conv2d(4, 16, 3, padding=1)).
    w_hwio = 0.05 * jax.random.normal(kw, (3, 3, Cin, Cout), dtype=jnp.float32)
    bias = 0.05 * jax.random.normal(kb, (Cout,), dtype=jnp.float32)
    alpha = jnp.float32(0.25)    # nn.PReLU() default init

    # Parameter prep happens once, outside the hot path.
    wb_flat, bias_row = build_upsample_params(w_hwio, bias, W, up_scale)

    out = upsample_block(x, wb_flat, bias_row, alpha, up_scale)
    out = jax.block_until_ready(out)
    assert out.shape == (N, Cin, H * up_scale, W * up_scale), out.shape

    # Reference: f32 XLA conv + bias + PReLU + pixel shuffle, NCHW output.
    x_nhwc = jnp.transpose(x, (0, 2, 3, 1))
    ref = jax.lax.conv_general_dilated(
        x_nhwc, w_hwio, window_strides=(1, 1), padding="SAME",
        dimension_numbers=("NHWC", "HWIO", "NHWC"))
    ref = ref + bias[None, None, None, :]
    ref = jnp.where(ref > 0, ref, alpha * ref)
    ref = ref.reshape(N, H, W, Cin, up_scale, up_scale)
    ref = jnp.transpose(ref, (0, 3, 1, 4, 2, 5)).reshape(
        N, Cin, H * up_scale, W * up_scale)

    # bf16 MXU operands with f32 accumulation -> loosened tolerance.
    max_err = float(jnp.max(jnp.abs(out - ref)))
    assert jnp.allclose(out, ref, atol=2e-2, rtol=2e-2), max_err

    print("KERNEL_OK")
</pallas_src>

<mosaic_0001>
module attributes {stable_mosaic.version = 11 : i64} {
  func.func @_fused_conv_bias_prelu_kernel(%arg0: i32, %arg1: memref<1x1xf32, #tpu.memory_space<smem>>, %arg2: memref<2x16x64xf32, #tpu.memory_space<vmem>>, %arg3: memref<192x256xbf16, #tpu.memory_space<vmem>>, %arg4: memref<1x256xf32, #tpu.memory_space<vmem>>, %arg5: memref<2x16x256xf32, #tpu.memory_space<vmem>>, %arg6: memref<2x16x192xbf16, #tpu.memory_space<vmem>>) attributes {dimension_semantics = [#tpu.dimension_semantics<parallel>], iteration_bounds = array<i64: 1>, scalar_prefetch = 0 : i64, scratch_operands = 1 : i64, tpu.core_type = #tpu.core_type<tc>, window_params = [{transform_indices = @transform_0, window_bounds = array<i64: 1, 1>}, {transform_indices = @transform_1, window_bounds = array<i64: 2, 16, 64>}, {pipeline_mode = #tpu.pipeline_mode<synchronous>, transform_indices = @transform_2, window_bounds = array<i64: 192, 256>}, {pipeline_mode = #tpu.pipeline_mode<synchronous>, transform_indices = @transform_3, window_bounds = array<i64: 1, 256>}, {transform_indices = @transform_4, window_bounds = array<i64: 2, 16, 256>}]} {
    %c0 = arith.constant 0 : index
    %c0_0 = arith.constant 0 : index
    %c0_1 = arith.constant 0 : index
    %0 = vector.load %arg2[%c0, %c0_0, %c0_1] : memref<2x16x64xf32, #tpu.memory_space<vmem>>, vector<2x16x64xf32>
    %1 = arith.truncf %0 : vector<2x16x64xf32> to vector<2x16x64xbf16>
    %cst = arith.constant 0.000000e+00 : bf16
    %2 = vector.broadcast %cst : bf16 to vector<2x1x64xbf16>
    %3 = vector.extract_strided_slice %1 {offsets = [0, 0, 0], sizes = [2, 15, 64], strides = [1, 1, 1]} : vector<2x16x64xbf16> to vector<2x15x64xbf16>
    %c0_2 = arith.constant 0 : index
    %c1 = arith.constant 1 : index
    %c0_3 = arith.constant 0 : index
    %4 = vector.load %arg6[%c0_2, %c1, %c0_3] : memref<2x16x192xbf16, #tpu.memory_space<vmem>>, vector<2x15x64xbf16>
    tpu.vector_store %arg6[%c0_2, %c1, %c0_3], %3 {strides = array<i32>} : memref<2x16x192xbf16, #tpu.memory_space<vmem>>, vector<2x15x64xbf16>,
    %c0_4 = arith.constant 0 : index
    %c0_5 = arith.constant 0 : index
    %c0_6 = arith.constant 0 : index
    %5 = vector.load %arg6[%c0_4, %c0_5, %c0_6] : memref<2x16x192xbf16, #tpu.memory_space<vmem>>, vector<2x1x64xbf16>
    tpu.vector_store %arg6[%c0_4, %c0_5, %c0_6], %2 {strides = array<i32>} : memref<2x16x192xbf16, #tpu.memory_space<vmem>>, vector<2x1x64xbf16>,
    %c0_7 = arith.constant 0 : index
    %c0_8 = arith.constant 0 : index
    %c64 = arith.constant 64 : index
    %6 = vector.load %arg6[%c0_7, %c0_8, %c64] : memref<2x16x192xbf16, #tpu.memory_space<vmem>>, vector<2x16x64xbf16>
    tpu.vector_store %arg6[%c0_7, %c0_8, %c64], %1 {strides = array<i32>} : memref<2x16x192xbf16, #tpu.memory_space<vmem>>, vector<2x16x64xbf16>,
    %7 = vector.extract_strided_slice %1 {offsets = [0, 1, 0], sizes = [2, 15, 64], strides = [1, 1, 1]} : vector<2x16x64xbf16> to vector<2x15x64xbf16>
    %c0_9 = arith.constant 0 : index
    %c0_10 = arith.constant 0 : index
    %c128 = arith.constant 128 : index
    %8 = vector.load %arg6[%c0_9, %c0_10, %c128] : memref<2x16x192xbf16, #tpu.memory_space<vmem>>, vector<2x15x64xbf16>
    tpu.vector_store %arg6[%c0_9, %c0_10, %c128], %7 {strides = array<i32>} : memref<2x16x192xbf16, #tpu.memory_space<vmem>>, vector<2x15x64xbf16>,
    %c0_11 = arith.constant 0 : index
    %c15 = arith.constant 15 : index
    %c128_12 = arith.constant 128 : index
    %9 = vector.load %arg6[%c0_11, %c15, %c128_12] : memref<2x16x192xbf16, #tpu.memory_space<vmem>>, vector<2x1x64xbf16>
    tpu.vector_store %arg6[%c0_11, %c15, %c128_12], %2 {strides = array<i32>} : memref<2x16x192xbf16, #tpu.memory_space<vmem>>, vector<2x1x64xbf16>,
    %c0_13 = arith.constant 0 : index
    %c0_14 = arith.constant 0 : index
    %c0_15 = arith.constant 0 : index
    %10 = vector.load %arg6[%c0_13, %c0_14, %c0_15] : memref<2x16x192xbf16, #tpu.memory_space<vmem>>, vector<2x16x192xbf16>
    %11 = vector.shape_cast %10 : vector<2x16x192xbf16> to vector<32x192xbf16>
    %c0_16 = arith.constant 0 : index
    %c0_17 = arith.constant 0 : index
    %12 = vector.load %arg3[%c0_16, %c0_17] : memref<192x256xbf16, #tpu.memory_space<vmem>>, vector<192x256xbf16>
    %cst_18 = arith.constant dense<0.000000e+00> : vector<32x256xf32>
    %13 = tpu.matmul %11, %12, %cst_18 {dimension_numbers = #tpu.dot_dimension_numbers<[1], [0], [0], [1], [0, 0, 1, 1], [], []>} : vector<32x192xbf16>, vector<192x256xbf16>, vector<32x256xf32> -> vector<32x256xf32>
    %c0_19 = arith.constant 0 : index
    %c0_20 = arith.constant 0 : index
    %14 = vector.load %arg4[%c0_19, %c0_20] : memref<1x256xf32, #tpu.memory_space<vmem>>, vector<1x256xf32>
    %15 = vector.broadcast %14 : vector<1x256xf32> to vector<32x256xf32>
    %16 = arith.addf %13, %15 : vector<32x256xf32>
    %c0_21 = arith.constant 0 : index
    %c0_22 = arith.constant 0 : index
    %17 = memref.load %arg1[%c0_21, %c0_22] : memref<1x1xf32, #tpu.memory_space<smem>>
    %cst_23 = arith.constant 0.000000e+00 : f32
    %18 = vector.broadcast %cst_23 : f32 to vector<32x256xf32>
    %19 = arith.cmpf ogt, %16, %18 : vector<32x256xf32>
    %20 = vector.broadcast %17 : f32 to vector<32x256xf32>
    %21 = arith.mulf %20, %16 : vector<32x256xf32>
    %22 = arith.select %19, %16, %21 : vector<32x256xi1>, vector<32x256xf32>
    %23 = vector.shape_cast %22 : vector<32x256xf32> to vector<2x16x256xf32>
    %c0_24 = arith.constant 0 : index
    %c0_25 = arith.constant 0 : index
    %c0_26 = arith.constant 0 : index
    %24 = vector.load %arg5[%c0_24, %c0_25, %c0_26] : memref<2x16x256xf32, #tpu.memory_space<vmem>>, vector<2x16x256xf32>
    tpu.vector_store %arg5[%c0_24, %c0_25, %c0_26], %23 {strides = array<i32>} : memref<2x16x256xf32, #tpu.memory_space<vmem>>, vector<2x16x256xf32>,
    return
  }
  func.func @transform_0(%arg0: i32) -> (i32, i32) {
    %c0_i32 = arith.constant 0 : i32
    %c0_i32_0 = arith.constant 0 : i32
    %c0_i32_1 = arith.constant 0 : i32
    return %c0_i32, %c0_i32_0 : i32, i32
  }
  func.func @transform_1(%arg0: i32) -> (i32, i32, i32) {
    %c0_i32 = arith.constant 0 : i32
    %c0_i32_0 = arith.constant 0 : i32
    %c0_i32_1 = arith.constant 0 : i32
    return %arg0, %c0_i32, %c0_i32_0 : i32, i32, i32
  }
  func.func @transform_2(%arg0: i32) -> (i32, i32) {
    %c0_i32 = arith.constant 0 : i32
    %c0_i32_0 = arith.constant 0 : i32
    %c0_i32_1 = arith.constant 0 : i32
    return %c0_i32, %c0_i32_0 : i32, i32
  }
  func.func @transform_3(%arg0: i32) -> (i32, i32) {
    %c0_i32 = arith.constant 0 : i32
    %c0_i32_0 = arith.constant 0 : i32
    %c0_i32_1 = arith.constant 0 : i32
    return %c0_i32, %c0_i32_0 : i32, i32
  }
  func.func @transform_4(%arg0: i32) -> (i32, i32, i32) {
    %c0_i32 = arith.constant 0 : i32
    %c0_i32_0 = arith.constant 0 : i32
    %c0_i32_1 = arith.constant 0 : i32
    return %arg0, %c0_i32, %c0_i32_0 : i32, i32, i32
  }
}

</mosaic_0001>

<llo_original>
// kernel: tpu_custom_call.1
$region0: #{tpu_custom_call.1}
  #allocation0 [shape = 'u32[]', space=smem, size = 0x4, offset = 0x4, fixed_abs, tag = 'smem constant byte address 0x4 - core index']
  #allocation1 [shape = 'u32[144,128]{1,0:T(1,128)}', space=vmem, size = 0x12000, scoped, tag = 'internal scratch']
  #allocation2 [shape = 'bf16[2,16,192]{2,1,0:T(16,128)(2,1)}', space=vmem, size = 0x4000, scoped, tag = 'scratch operand']
  #allocation3 [shape = 'f32[1,1]{1,0:T(1,128)S(6)}', space=smem, size = 0x200, scoped, tag = 'scoped memory for tpu_custom_call.1']
  %s0 = inlined_call_operand.<no memory space> [shape: f32[1,1], index: 0, kind: input, shape index: {}]
  %s1 = inlined_call_operand.hbm [shape: f32[2,16,64], index: 1, kind: input, shape index: {}]
  %s2 = inlined_call_operand.hbm [shape: bf16[192,256], index: 2, kind: input, shape index: {}]
  %s3 = inlined_call_operand.vmem [shape: f32[1,256], index: 3, kind: input, shape index: {}]
  %s4 = inlined_call_operand.hbm [shape: f32[2,16,256], index: 4, kind: output, shape index: {}]
  %s5 = sld [smem:[#allocation0]]
  $region34: #{tpu_custom_call.1} parent=0
    _
  %s7 = ssub.s32 1, %s5
  %s8 = scalar_select 0, %s7, %s5
  %9 = sst [smem:[#allocation3]] %s0
  $region1: #{tpu_custom_call.1} parent=0
    #allocation4 [shape = 'u8[16384]{0}', space=vmem, size = 0x4000, scoped, tag = 'input window, operand 1, single buffered']
    #allocation5 [shape = 's32[1]{0}', space=sflag, size = 0x4, scoped, tag = 'scoped memory for tpu_custom_call.1']
    #allocation6 [shape = 's32[1]{0}', space=sflag, size = 0x4, scoped, tag = 'scoped memory for tpu_custom_call.1']
    #allocation7 [shape = 'u8[98304]{0}', space=vmem, size = 0x18000, scoped, tag = 'input window, operand 2, single buffered']
    #allocation8 [shape = 's32[1]{0}', space=sflag, size = 0x4, scoped, tag = 'scoped memory for tpu_custom_call.1']
    #allocation9 [shape = 'u8[32768]{0}', space=vmem, size = 0x8000, scoped, tag = 'output window, operand 0, single buffered']
    %10 = vsyncpa [#allocation5], 0
    %11 = vsyncpa [#allocation8], 0
    %12 = vsyncpa [#allocation6], 0
    // Predicated region
    $region2: #{tpu_custom_call.1} parent=1 // pred_check
      _
    $region3: #{tpu_custom_call.1} parent=1 // pred_check_branch
      %14 = sbr.rel (0) target = $region5
    $region4: #{tpu_custom_call.1} parent=1 // pred_region
      _
    $region5: #{tpu_custom_call.1} parent=1 // pred_fallthru
      _
    // Predicated region
    $region6: #{tpu_custom_call.1} parent=1 // pred_check
      _
    $region7: #{tpu_custom_call.1} parent=1 // pred_check_branch
      %16 = sbr.rel (0) target = $region9
    $region8: #{tpu_custom_call.1} parent=1 // pred_region
      %s18 = ssub.s32 512, 512
      %19 = vsyncadd [#allocation5], %s18
      %s20 = sshll.u32 [#allocation4], 4
      %s21 = int_to_ptr.vmem [resolvable:$true] %s20
      %26 = dma.hbm_to_vmem [thread:$0]  %s1, 512, %s21, [#allocation5], 128, 128, 8
    $region9: #{tpu_custom_call.1} parent=1 // pred_fallthru
      _
    // Predicated region
    $region10: #{tpu_custom_call.1} parent=1 // pred_check
      _
    $region11: #{tpu_custom_call.1} parent=1 // pred_check_branch
      %28 = sbr.rel (0) target = $region13
    $region12: #{tpu_custom_call.1} parent=1 // pred_region
      %s30 = ssub.s32 3072, 3072
      %31 = vsyncadd [#allocation8], %s30
      %s32 = sshll.u32 [#allocation7], 4
      %s33 = int_to_ptr.vmem [resolvable:$true] %s32
      %38 = dma.hbm_to_vmem [thread:$0]  %s2, 3072, %s33, [#allocation8], 128, 128, 8
    $region13: #{tpu_custom_call.1} parent=1 // pred_fallthru
      _
    // Predicated region
    $region14: #{tpu_custom_call.1} parent=1 // pred_check
      _
    $region15: #{tpu_custom_call.1} parent=1 // pred_check_branch
      %40 = sbr.rel (0) target = $region17
    $region16: #{tpu_custom_call.1} parent=1 // pred_region
      _
    $region17: #{tpu_custom_call.1} parent=1 // pred_fallthru
      _
    // Predicated region
    $region18: #{tpu_custom_call.1} parent=1 // pred_check
      _
    $region19: #{tpu_custom_call.1} parent=1 // pred_check_branch
      %42 = sbr.rel (0) target = $region21
    $region20: #{tpu_custom_call.1} parent=1 // pred_region
      %43 = dma.done [#allocation5], 512
    $region21: #{tpu_custom_call.1} parent=1 // pred_fallthru
      _
    // Predicated region
    $region22: #{tpu_custom_call.1} parent=1 // pred_check
      _
    $region23: #{tpu_custom_call.1} parent=1 // pred_check_branch
      %45 = sbr.rel (0) target = $region25
    $region24: #{tpu_custom_call.1} parent=1 // pred_region
      %46 = dma.done [#allocation8], 3072
    $region25: #{tpu_custom_call.1} parent=1 // pred_fallthru
      _
    %v48 = vld [vmem:[#allocation4] sm:$0xff]
    %v49 = vld [vmem:[#allocation4 + $0x8] sm:$0xff]
    %v50 = vld [vmem:[#allocation4 + $0x10] sm:$0xff]
    %v51 = vld [vmem:[#allocation4 + $0x18] sm:$0xff]
    %v52 = vpack.c.bf16 %v49, %v48
    %v53 = vpack.c.bf16 %v51, %v50
    %v55 = vshrl.u32 %v52, 16
    %v57 = vrot.slane %v55, 7
    %v58 = vshll.u32 %v52, 16
    %v60 = vor.u32 %v57, %v58
    %v62 = vshrl.u32 %v53, 16
    %v64 = vrot.slane %v62, 7
    %v65 = vshll.u32 %v53, 16
    %v67 = vor.u32 %v64, %v65
    %vm70 = vcmask 523264
    %vm71 = vsmask.f32 7938
    %vm72 = vmand %vm70, %vm71
    %v73 = vld [vmem:[#allocation2] sm:$0xff]
    %v74 = vsel %vm72, %v60, %v73
    %75 = vst [vmem:[#allocation2] sm:$0xff] %v74
    %v76 = vld [vmem:[#allocation2 + $0x10] sm:$0xff]
    %v77 = vsel %vm72, %v67, %v76
    %78 = vst [vmem:[#allocation2 + $0x10] sm:$0xff] %v77
    %vm79 = vcmask 516096
    %vm80 = vsmask.f32 256
    %vm81 = vmand %vm79, %vm80
    %v82 = vld [vmem:[#allocation2] sm:$0x1]
    %v83 = vsel %vm81, 0, %v82
    %84 = vst [vmem:[#allocation2] sm:$0x1] %v83
    %v85 = vld [vmem:[#allocation2 + $0x10] sm:$0x1]
    %v86 = vsel %vm81, 0, %v85
    %87 = vst [vmem:[#allocation2 + $0x10] sm:$0x1] %v86
    %90 = vrot.lane.b32.xlu0 %v52, 64
    %v91 = vpop.permute.xlu0 %90
    %92 = vrot.lane.b32.xlu0 %v53, 64
    %v93 = vpop.permute.xlu0 %92
    %vm96 = vcmask 1048064
    %97 = vst.msk [vmem:[#allocation2] sm:$0xff] %vm96, %v91
    %98 = vst.msk [vmem:[#allocation2 + $0x10] sm:$0xff] %vm96, %v93
    %v99 = vrot.slane %v58, 1
    %v100 = vor.u32 %v55, %v99
    %v101 = vrot.slane %v65, 1
    %v102 = vor.u32 %v62, %v101
    %vm105 = vsmask.f32 7424
    %vm106 = vmand %vm70, %vm105
    %v107 = vld [vmem:[#allocation2 + $0x8] sm:$0xff]
    %v108 = vsel %vm106, %v100, %v107
    %109 = vst [vmem:[#allocation2 + $0x8] sm:$0xff] %v108
    %v110 = vld [vmem:[#allocation2 + $0x18] sm:$0xff]
    %v111 = vsel %vm106, %v102, %v110
    %112 = vst [vmem:[#allocation2 + $0x18] sm:$0xff] %v111
    %vm113 = vcmask 523271
    %vm114 = vsmask.f32 7966
    %vm115 = vmand %vm113, %vm114
    %v116 = vld [vmem:[#allocation2 + $0x8] sm:$0x80]
    %v117 = vsel %vm115, 0, %v116
    %118 = vst [vmem:[#allocation2 + $0x8] sm:$0x80] %v117
    %v119 = vld [vmem:[#allocation2 + $0x18] sm:$0x80]
    %v120 = vsel %vm115, 0, %v119
    %121 = vst [vmem:[#allocation2 + $0x18] sm:$0x80] %v120
    %v122 = vld [vmem:[#allocation2] sm:$0xff]
    %v123 = vld [vmem:[#allocation2 + $0x8] sm:$0xff]
    %v124 = vld [vmem:[#allocation2 + $0x10] sm:$0xff]
    %v125 = vld [vmem:[#allocation2 + $0x18] sm:$0xff]
    %v126 = vld [vmem:[#allocation7] sm:$0xff]
    %v127 = vld [vmem:[#allocation7 + $0x8] sm:$0xff]
    %v128 = vld [vmem:[#allocation7 + $0x10] sm:$0xff]
    %v129 = vld [vmem:[#allocation7 + $0x18] sm:$0xff]
    %v130 = vld [vmem:[#allocation7 + $0x20] sm:$0xff]
    %v131 = vld [vmem:[#allocation7 + $0x28] sm:$0xff]
    %v132 = vld [vmem:[#allocation7 + $0x30] sm:$0xff]
    %v133 = vld [vmem:[#allocation7 + $0x38] sm:$0xff]
    %v134 = vld [vmem:[#allocation7 + $0x40] sm:$0xff]
    %v135 = vld [vmem:[#allocation7 + $0x48] sm:$0xff]
    %v136 = vld [vmem:[#allocation7 + $0x50] sm:$0xff]
    %v137 = vld [vmem:[#allocation7 + $0x58] sm:$0xff]
    %v138 = vld [vmem:[#allocation7 + $0x60] sm:$0xff]
    %v139 = vld [vmem:[#allocation7 + $0x68] sm:$0xff]
    %v140 = vld [vmem:[#allocation7 + $0x70] sm:$0xff]
    %v141 = vld [vmem:[#allocation7 + $0x78] sm:$0xff]
    %v142 = vld [vmem:[#allocation7 + $0x80] sm:$0xff]
    %v143 = vld [vmem:[#allocation7 + $0x88] sm:$0xff]
    %v144 = vld [vmem:[#allocation7 + $0x90] sm:$0xff]
    %v145 = vld [vmem:[#allocation7 + $0x98] sm:$0xff]
    %v146 = vld [vmem:[#allocation7 + $0xa0] sm:$0xff]
    %v147 = vld [vmem:[#allocation7 + $0xa8] sm:$0xff]
    %v148 = vld [vmem:[#allocation7 + $0xb0] sm:$0xff]
    %v149 = vld [vmem:[#allocation7 + $0xb8] sm:$0xff]
    %v150 = vld [vmem:[%s3] sm:$0x3]
    %v152 = vlaneseq
    %v153 = vshrl.u32 %v152, 7
    %v154 = vsub.s32 0, %v153
    %v155 = vrot.slane %v150, %v154
    %v156 = vlaneseq
    %v157 = vshrl.u32 %v156, 7
    %v158 = vsub.s32 1, %v157
    %v159 = vrot.slane %v150, %v158
    %v186 = vunpack.c.l.b16 %v126
    %v187 = vunpack.c.h.b16 %v126
    %v188 = vunpack.c.l.b16 %v127
    %v189 = vunpack.c.h.b16 %v127
    %v190 = vunpack.c.l.b16 %v128
    %v191 = vunpack.c.h.b16 %v128
    %v192 = vunpack.c.l.b16 %v129
    %v193 = vunpack.c.h.b16 %v129
    %v194 = vunpack.c.l.b16 %v130
    %v195 = vunpack.c.h.b16 %v130
    %v196 = vunpack.c.l.b16 %v131
    %v197 = vunpack.c.h.b16 %v131
    %v198 = vunpack.c.l.b16 %v132
    %v199 = vunpack.c.h.b16 %v132
    %v200 = vunpack.c.l.b16 %v133
    %v201 = vunpack.c.h.b16 %v133
    %v202 = vunpack.c.l.b16 %v134
    %v203 = vunpack.c.h.b16 %v134
    %v204 = vunpack.c.l.b16 %v135
    %v205 = vunpack.c.h.b16 %v135
    %v206 = vunpack.c.l.b16 %v136
    %v207 = vunpack.c.h.b16 %v136
    %v208 = vunpack.c.l.b16 %v137
    %v209 = vunpack.c.h.b16 %v137
    %v210 = vunpack.c.l.b16 %v138
    %v211 = vunpack.c.h.b16 %v138
    %v212 = vunpack.c.l.b16 %v139
    %v213 = vunpack.c.h.b16 %v139
    %v214 = vunpack.c.l.b16 %v140
    %v215 = vunpack.c.h.b16 %v140
    %v216 = vunpack.c.l.b16 %v141
    %v217 = vunpack.c.h.b16 %v141
    %v218 = vunpack.c.l.b16 %v142
    %v219 = vunpack.c.h.b16 %v142
    %v220 = vunpack.c.l.b16 %v143
    %v221 = vunpack.c.h.b16 %v143
    %v222 = vunpack.c.l.b16 %v144
    %v223 = vunpack.c.h.b16 %v144
    %v224 = vunpack.c.l.b16 %v145
    %v225 = vunpack.c.h.b16 %v145
    %v226 = vunpack.c.l.b16 %v146
    %v227 = vunpack.c.h.b16 %v146
    %v228 = vunpack.c.l.b16 %v147
    %v229 = vunpack.c.h.b16 %v147
    %v230 = vunpack.c.l.b16 %v148
    %v231 = vunpack.c.h.b16 %v148
    %v232 = vunpack.c.l.b16 %v149
    %v233 = vunpack.c.h.b16 %v149
    %v234 = vpack.c.b16 %v188, %v186
    %v235 = vpack.c.b16 %v189, %v187
    %v236 = vpack.c.b16 %v192, %v190
    %v237 = vpack.c.b16 %v193, %v191
    %v238 = vpack.c.b16 %v196, %v194
    %v239 = vpack.c.b16 %v197, %v195
    %v240 = vpack.c.b16 %v200, %v198
    %v241 = vpack.c.b16 %v201, %v199
    %v242 = vpack.c.b16 %v204, %v202
    %v243 = vpack.c.b16 %v205, %v203
    %v244 = vpack.c.b16 %v208, %v206
    %v245 = vpack.c.b16 %v209, %v207
    %v246 = vpack.c.b16 %v212, %v210
    %v247 = vpack.c.b16 %v213, %v211
    %v248 = vpack.c.b16 %v216, %v214
    %v249 = vpack.c.b16 %v217, %v215
    %v250 = vpack.c.b16 %v220, %v218
    %v251 = vpack.c.b16 %v221, %v219
    %v252 = vpack.c.b16 %v224, %v222
    %v253 = vpack.c.b16 %v225, %v223
    %v254 = vpack.c.b16 %v228, %v226
    %v255 = vpack.c.b16 %v229, %v227
    %v256 = vpack.c.b16 %v232, %v230
    %v257 = vpack.c.b16 %v233, %v231
    %vm282 = vcmask 523264
    %v284 = vsel %vm282, %v123, 0
    %v287 = vsel %vm282, %v125, 0
    %289 = vmatprep.subr.bf16.mxu0 %v235
    %290 = vmatpush1.bf16.msra.mxu0 %v234
    %291 = vmatprep.subr.bf16.mxu0 %v237
    %292 = vmatpush1.bf16.msra.mxu0 %v236
    %293 = vmatprep.subr.bf16.mxu0 %v239
    %294 = vmatpush1.bf16.msra.mxu0 %v238
    %295 = vmatprep.subr.bf16.mxu0 %v241
    %296 = vmatpush1.bf16.msra.mxu0 %v240
    %297 = vmatprep.subr.bf16.mxu0 %v243
    %298 = vmatpush1.bf16.msra.mxu0 %v242
    %299 = vmatprep.subr.bf16.mxu0 %v245
    %300 = vmatpush1.bf16.msra.mxu0 %v244
    %301 = vmatprep.subr.bf16.mxu0 %v247
    %302 = vmatpush1.bf16.msra.mxu0 %v246
    %303 = vmatprep.subr.bf16.mxu0 %v249
    %304 = vmatpush1.bf16.msra.mxu0 %v248
    %305 = vmatprep.subr.bf16.mxu0 %v251
    %306 = vmatpush1.bf16.msra.mxu0 %v250
    %307 = vmatprep.subr.bf16.mxu0 %v253
    %308 = vmatpush1.bf16.msra.mxu0 %v252
    %309 = vmatprep.subr.bf16.mxu0 %v255
    %310 = vmatpush1.bf16.msra.mxu0 %v254
    %311 = vmatprep.subr.bf16.mxu0 %v257
    %312 = vmatpush1.bf16.msra.mxu0 %v256
    %313 = vmatprep.subr.bf16.mxu0 0
    %314 = vmatpush1.bf16.msra.mxu0 0
    %315 = vmatprep.subr.bf16.mxu0 0
    %316 = vmatpush1.bf16.msra.mxu0 0
    %317 = vmatprep.subr.bf16.mxu0 0
    %318 = vmatpush1.bf16.msra.mxu0 0
    %319 = vmatprep.subr.bf16.mxu0 0
    %320 = vmatpush1.bf16.msra.mxu0 0
    %321 = vmatprep.mubr.bf16.mxu0 %v284
    %322 = vmatmul.mubr.bf16.gmra.mrb[0].mxu0 %v122
    %v323 = vpop.f32.mrb[0].mxu0
    %v324 = vadd.f32 %v155, %v323
    %v325 = vpop.f32.mrb[0].mxu0
    %v326 = vadd.f32 %v159, %v325
    %v327 = vpop.f32.mrb[0].mxu0
    %v328 = vadd.f32 %v155, %v327
    %v329 = vpop.f32.mrb[0].mxu0
    %v330 = vadd.f32 %v159, %v329
    %331 = vmatprep.mubr.bf16.mxu0 %v287
    %332 = vmatmul.mubr.bf16.gmra.mrb[0].mxu0 %v124
    %v333 = vpop.f32.mrb[0].mxu0
    %v334 = vadd.f32 %v155, %v333
    %v335 = vpop.f32.mrb[0].mxu0
    %v336 = vadd.f32 %v159, %v335
    %v337 = vpop.f32.mrb[0].mxu0
    %v338 = vadd.f32 %v155, %v337
    %v339 = vpop.f32.mrb[0].mxu0
    %v340 = vadd.f32 %v159, %v339
    %341 = vdwg.mxu0
    %s342 = sld [smem:[#allocation3]]
    %vm343 = vcmp.gt.f32.partialorder %v324, 0.0
    %vm344 = vcmp.gt.f32.partialorder %v326, 0.0
    %vm345 = vcmp.gt.f32.partialorder %v328, 0.0
    %vm346 = vcmp.gt.f32.partialorder %v330, 0.0
    %vm347 = vcmp.gt.f32.partialorder %v334, 0.0
    %vm348 = vcmp.gt.f32.partialorder %v336, 0.0
    %vm349 = vcmp.gt.f32.partialorder %v338, 0.0
    %vm350 = vcmp.gt.f32.partialorder %v340, 0.0
    %v351 = vstv %s342
    %v352 = vmul.f32 %v351, %v324
    %v353 = vmul.f32 %v351, %v326
    %v354 = vmul.f32 %v351, %v328
    %v355 = vmul.f32 %v351, %v330
    %v356 = vmul.f32 %v351, %v334
    %v357 = vmul.f32 %v351, %v336
    %v358 = vmul.f32 %v351, %v338
    %v359 = vmul.f32 %v351, %v340
    %v360 = vsel %vm343, %v324, %v352
    %v361 = vsel %vm344, %v326, %v353
    %v362 = vsel %vm345, %v328, %v354
    %v363 = vsel %vm346, %v330, %v355
    %v364 = vsel %vm347, %v334, %v356
    %v365 = vsel %vm348, %v336, %v357
    %v366 = vsel %vm349, %v338, %v358
    %v367 = vsel %vm350, %v340, %v359
    %368 = vst [vmem:[#allocation9] sm:$0xff] %v360
    %369 = vst [vmem:[#allocation9 + $0x8] sm:$0xff] %v361
    %370 = vst [vmem:[#allocation9 + $0x10] sm:$0xff] %v362
    %371 = vst [vmem:[#allocation9 + $0x18] sm:$0xff] %v363
    %372 = vst [vmem:[#allocation9 + $0x20] sm:$0xff] %v364
    %373 = vst [vmem:[#allocation9 + $0x28] sm:$0xff] %v365
    %374 = vst [vmem:[#allocation9 + $0x30] sm:$0xff] %v366
    %375 = vst [vmem:[#allocation9 + $0x38] sm:$0xff] %v367
    // Predicated region
    $region26: #{tpu_custom_call.1} parent=1 // pred_check
      _
    $region27: #{tpu_custom_call.1} parent=1 // pred_check_branch
      %377 = sbr.rel (0) target = $region29
    $region28: #{tpu_custom_call.1} parent=1 // pred_region
      %s379 = ssub.s32 1024, 1024
      %380 = vsyncadd [#allocation6], %s379
      %s381 = sshll.u32 [#allocation9], 4
      %s382 = int_to_ptr.vmem [resolvable:$true] %s381
      %387 = dma.vmem_to_hbm [thread:$0]  %s382, 1024, %s4, [#allocation6], 256, 256, 16
    $region29: #{tpu_custom_call.1} parent=1 // pred_fallthru
      _
    // Predicated region
    $region30: #{tpu_custom_call.1} parent=1 // pred_check
      _
    $region31: #{tpu_custom_call.1} parent=1 // pred_check_branch
      %389 = sbr.rel (0) target = $region33
    $region32: #{tpu_custom_call.1} parent=1 // pred_region
      %390 = dma.done [#allocation6], 1024
    $region33: #{tpu_custom_call.1} parent=1 // pred_fallthru
      _
    %391 = vsyncpa [#allocation5], 1
    %392 = vsyncpa [#allocation8], 1
    %393 = vsyncpa [#allocation6], 1

</llo_original>
